<compile_context>
chip_gen: v6e
topology: v6e:2x2x1
jax: 0.10.0
libtpu: 0.0.40
codegen_flags: <defaults>
</compile_context>

<pallas_src>
import functools

import jax
import jax.numpy as jnp
from jax.experimental import pallas as pl
from jax.experimental.pallas import tpu as pltpu

BN_EPS = 1e-5


def _round_up(a, b):
    return (a + b - 1) // b * b


# ----------------------------------------------------------------------------
# Pass 1: folded mat-vec (F -> 1), feature-major, + per-tile BN partials.
# ----------------------------------------------------------------------------
def matvec_stats_kernel(x_ref, w_ref, b_ref, y_ref, sum_ref, m2_ref, *,
                        m_valid, tm):
    """
    x_ref:   (F, TM)   VMEM  feature-major input tile (rows on lanes)
    w_ref:   (F, 1)    VMEM  folded weight column (broadcast over lanes)
    b_ref:   (1,)      SMEM  folded bias scalar
    y_ref:   (1, TM)   VMEM  staged pre-BN activation (lane-dense)
    sum_ref: (1, 1, 1) VMEM  per-tile partial sum of y
    m2_ref:  (1, 1, 1) VMEM  per-tile partial centered sum-of-squares of y
    """
    x = x_ref[...]                                    # (F, TM)
    w = w_ref[...]                                    # (F, 1) -> lane broadcast
    y = jnp.sum(x * w, axis=0, keepdims=True) + b_ref[0]      # (1, TM)
    y_ref[...] = y                                    # unmasked lane-dense store

    i = pl.program_id(0)
    rem = m_valid - i * tm          # valid rows remaining from this tile start

    @pl.when(rem >= tm)             # interior tile: unmasked fast path
    def _():
        s = jnp.sum(y)
        d = y - s * (1.0 / tm)
        sum_ref[...] = jnp.reshape(s, (1, 1, 1))
        m2_ref[...] = jnp.reshape(jnp.sum(d * d), (1, 1, 1))

    @pl.when(rem < tm)              # (single) partial tile: mask overhang lanes
    def _():
        col = jax.lax.broadcasted_iota(jnp.int32, (1, tm), 1)
        valid = col < rem
        yv = jnp.where(valid, y, 0.0)
        s = jnp.sum(yv)
        cnt = jnp.maximum(rem, 1).astype(jnp.float32)
        d = jnp.where(valid, y - s / cnt, 0.0)
        sum_ref[...] = jnp.reshape(s, (1, 1, 1))
        m2_ref[...] = jnp.reshape(jnp.sum(d * d), (1, 1, 1))


# ----------------------------------------------------------------------------
# Pass 2: BatchNorm affine (precomputed scale/shift) + ReLU, lane-dense blocks.
# ----------------------------------------------------------------------------
def bn_relu_kernel(y_ref, scale_ref, shift_ref, o_ref):
    o_ref[...] = jnp.maximum(y_ref[...] * scale_ref[0] + shift_ref[0], 0.0)


# ----------------------------------------------------------------------------
# Wrapper
# ----------------------------------------------------------------------------
def out_layer_forward(x, params, *, tile_rows=32768):
    """x: (B, N, in_num) float32 -> (B, N, 1) float32 (training-mode BN fwd)."""
    w1, b1, w2, b2, gamma, beta = params
    B, N, F = x.shape
    M = B * N

    # ---- fold Linear(F->H) and Linear(H->1): y = x @ w_eff + b_eff -----------
    w_eff = (w1 @ w2).astype(jnp.float32)                        # (F, 1)
    b_eff = (b1 @ w2 + b2).reshape(1).astype(jnp.float32)        # (1,) scalar

    # ---- feature-major feed (rows on lanes); one XLA transpose ---------------
    # TODO(synk): if the producer can emit x feature-major (and/or bf16 on
    # v6e/v7x) this transpose and half the dominant read traffic disappear.
    xT = jnp.transpose(x.reshape(M, F).astype(jnp.float32))      # (F, M)

    Mx = M
    if M < 128:                      # degenerate tiny case: pad a few lanes
        xT = jnp.pad(xT, ((0, 0), (0, 128 - M)))
        Mx = 128

    # ---- tiling ----------------------------------------------------------------
    # TM rows per pass-1 step: x tile = F*TM*4 B (~640 KiB at 32768 rows) + y
    # tile 128 KiB -> ~4-5 MiB double-buffered VMEM, safe vs. the 16 MiB v5e
    # scoped default and near the HBM roofline on v5e/v6e.  On v7x (3.2 TB/s)
    # a larger tile_rows (e.g. 131072, with vmem_limit_bytes raised) amortizes
    # the ~0.35 us/step overhead better.
    TM = min(_round_up(tile_rows, 128), (Mx // 128) * 128)
    T = pl.cdiv(Mx, TM)
    My = _round_up(Mx, 128)          # lane extent of the staged y (>= M)

    # ---- pass 1: streaming mat-vec + per-tile BN partials ("parallel" grid) --
    kernel1 = functools.partial(matvec_stats_kernel, m_valid=M, tm=TM)
    y, psum, pm2 = pl.pallas_call(
        kernel1,
        grid=(T,),
        in_specs=[
            pl.BlockSpec((F, TM), lambda i: (0, i)),             # x tile
            pl.BlockSpec((F, 1), lambda i: (0, 0)),              # folded weight
            pl.BlockSpec(memory_space=pltpu.MemorySpace.SMEM),   # folded bias
        ],
        out_specs=(
            pl.BlockSpec((1, TM), lambda i: (0, i)),             # staged y
            pl.BlockSpec((1, 1, 1), lambda i: (i, 0, 0)),        # partial sum
            pl.BlockSpec((1, 1, 1), lambda i: (i, 0, 0)),        # partial M2
        ),
        out_shape=(
            jax.ShapeDtypeStruct((1, My), jnp.float32),
            jax.ShapeDtypeStruct((T, 1, 1), jnp.float32),
            jax.ShapeDtypeStruct((T, 1, 1), jnp.float32),
        ),
        compiler_params=pltpu.CompilerParams(dimension_semantics=("parallel",)),
    )(xT, w_eff, b_eff)

    # ---- tiny XLA combine (Chan parallel variance) -> BN scale / shift -------
    n = jnp.float32(M)
    sums = psum.reshape(T)
    m2s = pm2.reshape(T)
    counts = jnp.clip(M - jnp.arange(T) * TM, 0, TM).astype(jnp.float32)
    mean_i = sums / jnp.maximum(counts, 1.0)
    mean = jnp.sum(sums) / n
    m2 = jnp.sum(m2s) + jnp.sum(counts * jnp.square(mean_i - mean))
    var = jnp.maximum(m2 / n, 0.0)                    # biased variance
    inv_std = jax.lax.rsqrt(var + BN_EPS)
    g = gamma.reshape(()).astype(jnp.float32)
    bt = beta.reshape(()).astype(jnp.float32)
    scale = jnp.reshape(g * inv_std, (1,))
    shift = jnp.reshape(bt - mean * g * inv_std, (1,))

    # ---- pass 2: normalize + ReLU on a lane-dense (rows, 128) view -----------
    rows = My // 128
    y2 = y.reshape(rows, 128)                         # free contiguous reshape
    rblk = rows if rows <= 2048 else 2048             # <= ~1 MiB per block
    out2 = pl.pallas_call(
        bn_relu_kernel,
        grid=(pl.cdiv(rows, rblk),),
        in_specs=[
            pl.BlockSpec((rblk, 128), lambda i: (i, 0)),
            pl.BlockSpec(memory_space=pltpu.MemorySpace.SMEM),   # scale
            pl.BlockSpec(memory_space=pltpu.MemorySpace.SMEM),   # shift
        ],
        out_specs=pl.BlockSpec((rblk, 128), lambda i: (i, 0)),
        out_shape=jax.ShapeDtypeStruct((rows, 128), jnp.float32),
        compiler_params=pltpu.CompilerParams(dimension_semantics=("parallel",)),
    )(y2, scale, shift)

    return out2.reshape(My)[:M].reshape(B, N, 1)


# ----------------------------------------------------------------------------
# Parameter init (PyTorch-style) and pure-JAX reference (unfolded).
# ----------------------------------------------------------------------------
def init_params(key, in_num, hidden):
    k1, k2, k3, k4 = jax.random.split(key, 4)
    bound1 = 1.0 / (in_num ** 0.5)
    w1 = jax.random.uniform(k1, (in_num, hidden), jnp.float32, -bound1, bound1)
    b1 = jax.random.uniform(k2, (1, hidden), jnp.float32, -bound1, bound1)
    bound2 = 1.0 / (hidden ** 0.5)
    w2 = jax.random.uniform(k3, (hidden, 1), jnp.float32, -bound2, bound2)
    b2 = jax.random.uniform(k4, (1, 1), jnp.float32, -bound2, bound2)
    gamma = jnp.ones((1, 1), jnp.float32)   # BN weight init
    beta = jnp.zeros((1, 1), jnp.float32)   # BN bias init
    return w1, b1, w2, b2, gamma, beta


def reference_forward(x, params):
    """Pure-JAX reference matching the PyTorch training-mode forward (unfolded)."""
    w1, b1, w2, b2, gamma, beta = params
    h = x @ w1 + b1[0]
    y = h @ w2 + b2[0]
    mean = jnp.mean(y)
    var = jnp.mean((y - mean) ** 2)
    y_hat = (y - mean) / jnp.sqrt(var + BN_EPS)
    return jnp.maximum(y_hat * gamma[0, 0] + beta[0, 0], 0.0)


if __name__ == "__main__":
    # Shapes consistent with the module's example input torch.randn(2, 15, 5);
    # small hidden dim for a quick test.
    B, N, IN_NUM, HIDDEN = 2, 15, 5, 32

    key = jax.random.PRNGKey(0)
    kx, kp = jax.random.split(key)
    x = jax.random.normal(kx, (B, N, IN_NUM), jnp.float32)
    params = init_params(kp, IN_NUM, HIDDEN)

    fwd = jax.jit(out_layer_forward)
    out = jax.block_until_ready(fwd(x, params))

    ref = reference_forward(x, params)
    assert out.shape == (B, N, 1)
    max_err = float(jnp.max(jnp.abs(out - ref)))
    assert jnp.allclose(out, ref, atol=1e-4, rtol=1e-4), (
        f"Pallas kernel mismatch vs reference, max |err| = {max_err}")

    print("KERNEL_OK")
</pallas_src>

<mosaic_0001>
module attributes {stable_mosaic.version = 11 : i64} {
  func.func @bn_relu_kernel(%arg0: i32, %arg1: memref<1x128xf32, #tpu.memory_space<vmem>>, %arg2: memref<1xf32, #tpu.memory_space<smem>>, %arg3: memref<1xf32, #tpu.memory_space<smem>>, %arg4: memref<1x128xf32, #tpu.memory_space<vmem>>) attributes {dimension_semantics = [#tpu.dimension_semantics<parallel>], iteration_bounds = array<i64: 1>, scalar_prefetch = 0 : i64, scratch_operands = 0 : i64, tpu.core_type = #tpu.core_type<tc>, window_params = [{transform_indices = @transform_0, window_bounds = array<i64: 1, 128>}, {transform_indices = @transform_1, window_bounds = array<i64: 1>}, {transform_indices = @transform_2, window_bounds = array<i64: 1>}, {transform_indices = @transform_3, window_bounds = array<i64: 1, 128>}]} {
    %c0 = arith.constant 0 : index
    %c0_0 = arith.constant 0 : index
    %0 = vector.load %arg1[%c0, %c0_0] : memref<1x128xf32, #tpu.memory_space<vmem>>, vector<1x128xf32>
    %c0_1 = arith.constant 0 : index
    %1 = memref.load %arg2[%c0_1] : memref<1xf32, #tpu.memory_space<smem>>
    %2 = vector.broadcast %1 : f32 to vector<1x128xf32>
    %3 = arith.mulf %0, %2 : vector<1x128xf32>
    %c0_2 = arith.constant 0 : index
    %4 = memref.load %arg3[%c0_2] : memref<1xf32, #tpu.memory_space<smem>>
    %5 = vector.broadcast %4 : f32 to vector<1x128xf32>
    %6 = arith.addf %3, %5 : vector<1x128xf32>
    %cst = arith.constant 0.000000e+00 : f32
    %7 = vector.broadcast %cst : f32 to vector<1x128xf32>
    %8 = arith.maximumf %6, %7 : vector<1x128xf32>
    %c0_3 = arith.constant 0 : index
    %c0_4 = arith.constant 0 : index
    %9 = vector.load %arg4[%c0_3, %c0_4] : memref<1x128xf32, #tpu.memory_space<vmem>>, vector<1x128xf32>
    tpu.vector_store %arg4[%c0_3, %c0_4], %8 {strides = array<i32>} : memref<1x128xf32, #tpu.memory_space<vmem>>, vector<1x128xf32>,
    return
  }
  func.func @transform_0(%arg0: i32) -> (i32, i32) {
    %c0_i32 = arith.constant 0 : i32
    %c0_i32_0 = arith.constant 0 : i32
    return %arg0, %c0_i32 : i32, i32
  }
  func.func @transform_1(%arg0: i32) -> i32 {
    %c0_i32 = arith.constant 0 : i32
    %c0_i32_0 = arith.constant 0 : i32
    return %c0_i32 : i32
  }
  func.func @transform_2(%arg0: i32) -> i32 {
    %c0_i32 = arith.constant 0 : i32
    %c0_i32_0 = arith.constant 0 : i32
    return %c0_i32 : i32
  }
  func.func @transform_3(%arg0: i32) -> (i32, i32) {
    %c0_i32 = arith.constant 0 : i32
    %c0_i32_0 = arith.constant 0 : i32
    return %arg0, %c0_i32 : i32, i32
  }
}

module attributes {stable_mosaic.version = 11 : i64} {
  func.func @matvec_stats_kernel(%arg0: i32, %arg1: memref<5x128xf32, #tpu.memory_space<vmem>>, %arg2: memref<5x1xf32, #tpu.memory_space<vmem>>, %arg3: memref<1xf32, #tpu.memory_space<smem>>, %arg4: memref<1x128xf32, #tpu.memory_space<vmem>>, %arg5: memref<1x1x1xf32, #tpu.memory_space<vmem>>, %arg6: memref<1x1x1xf32, #tpu.memory_space<vmem>>) attributes {dimension_semantics = [#tpu.dimension_semantics<parallel>], iteration_bounds = array<i64: 1>, scalar_prefetch = 0 : i64, scratch_operands = 0 : i64, tpu.core_type = #tpu.core_type<tc>, window_params = [{transform_indices = @transform_0, window_bounds = array<i64: 5, 128>}, {pipeline_mode = #tpu.pipeline_mode<synchronous>, transform_indices = @transform_1, window_bounds = array<i64: 5, 1>}, {transform_indices = @transform_2, window_bounds = array<i64: 1>}, {transform_indices = @transform_3, window_bounds = array<i64: 1, 128>}, {transform_indices = @transform_4, window_bounds = array<i64: 1, 1, 1>}, {transform_indices = @transform_5, window_bounds = array<i64: 1, 1, 1>}]} {
    %c0 = arith.constant 0 : index
    %c0_0 = arith.constant 0 : index
    %0 = vector.load %arg1[%c0, %c0_0] : memref<5x128xf32, #tpu.memory_space<vmem>>, vector<5x128xf32>
    %c0_1 = arith.constant 0 : index
    %c0_2 = arith.constant 0 : index
    %1 = vector.load %arg2[%c0_1, %c0_2] : memref<5x1xf32, #tpu.memory_space<vmem>>, vector<5x1xf32>
    %2 = vector.broadcast %1 : vector<5x1xf32> to vector<5x128xf32>
    %3 = arith.mulf %0, %2 : vector<5x128xf32>
    %cst = arith.constant dense<0.000000e+00> : vector<128xf32>
    %4 = vector.multi_reduction <add>, %3, %cst [0] : vector<5x128xf32> to vector<128xf32>
    %5 = vector.shape_cast %4 : vector<128xf32> to vector<1x128xf32>
    %c0_3 = arith.constant 0 : index
    %6 = memref.load %arg3[%c0_3] : memref<1xf32, #tpu.memory_space<smem>>
    %7 = vector.broadcast %6 : f32 to vector<1x128xf32>
    %8 = arith.addf %5, %7 : vector<1x128xf32>
    %c0_4 = arith.constant 0 : index
    %c0_5 = arith.constant 0 : index
    %9 = vector.load %arg4[%c0_4, %c0_5] : memref<1x128xf32, #tpu.memory_space<vmem>>, vector<1x128xf32>
    tpu.vector_store %arg4[%c0_4, %c0_5], %8 {strides = array<i32>} : memref<1x128xf32, #tpu.memory_space<vmem>>, vector<1x128xf32>,
    %c128_i32 = arith.constant 128 : i32
    %10 = arith.muli %arg0, %c128_i32 : i32
    %c30_i32 = arith.constant 30 : i32
    %11 = arith.subi %c30_i32, %10 : i32
    %c128_i32_6 = arith.constant 128 : i32
    %12 = arith.cmpi sge, %11, %c128_i32_6 : i32
    %13 = arith.extui %12 : i1 to i32
    %c0_i32 = arith.constant 0 : i32
    %14 = arith.cmpi ne, %13, %c0_i32 : i32
    scf.if %14 {
      %18 = vector.shape_cast %8 : vector<1x128xf32> to vector<1x1x128xf32>
      %cst_9 = arith.constant dense<0.000000e+00> : vector<1xf32>
      %19 = vector.multi_reduction <add>, %18, %cst_9 [1, 2] : vector<1x1x128xf32> to vector<1xf32>
      %20 = vector.shape_cast %19 : vector<1xf32> to vector<1x1x1xf32>
      %21 = vector.extract %20[0, 0, 0] : f32 from vector<1x1x1xf32>
      %cst_10 = arith.constant 7.812500e-03 : f32
      %22 = arith.mulf %21, %cst_10 : f32
      %23 = vector.broadcast %22 : f32 to vector<1x128xf32>
      %24 = arith.subf %8, %23 : vector<1x128xf32>
      %25 = vector.broadcast %21 : f32 to vector<1x1x1xf32>
      %c0_11 = arith.constant 0 : index
      %c0_12 = arith.constant 0 : index
      %c0_13 = arith.constant 0 : index
      %26 = vector.load %arg5[%c0_11, %c0_12, %c0_13] : memref<1x1x1xf32, #tpu.memory_space<vmem>>, vector<1x1x1xf32>
      tpu.vector_store %arg5[%c0_11, %c0_12, %c0_13], %25 {strides = array<i32>} : memref<1x1x1xf32, #tpu.memory_space<vmem>>, vector<1x1x1xf32>,
      %27 = arith.mulf %24, %24 : vector<1x128xf32>
      %28 = vector.shape_cast %27 : vector<1x128xf32> to vector<1x1x128xf32>
      %cst_14 = arith.constant dense<0.000000e+00> : vector<1xf32>
      %29 = vector.multi_reduction <add>, %28, %cst_14 [1, 2] : vector<1x1x128xf32> to vector<1xf32>
      %30 = vector.shape_cast %29 : vector<1xf32> to vector<1x1x1xf32>
      %31 = vector.extract %30[0, 0, 0] : f32 from vector<1x1x1xf32>
      %32 = vector.broadcast %31 : f32 to vector<1x1x1xf32>
      %c0_15 = arith.constant 0 : index
      %c0_16 = arith.constant 0 : index
      %c0_17 = arith.constant 0 : index
      %33 = vector.load %arg6[%c0_15, %c0_16, %c0_17] : memref<1x1x1xf32, #tpu.memory_space<vmem>>, vector<1x1x1xf32>
      tpu.vector_store %arg6[%c0_15, %c0_16, %c0_17], %32 {strides = array<i32>} : memref<1x1x1xf32, #tpu.memory_space<vmem>>, vector<1x1x1xf32>,
    } else {
    }
    %c128_i32_7 = arith.constant 128 : i32
    %15 = arith.cmpi slt, %11, %c128_i32_7 : i32
    %16 = arith.extui %15 : i1 to i32
    %c0_i32_8 = arith.constant 0 : i32
    %17 = arith.cmpi ne, %16, %c0_i32_8 : i32
    scf.if %17 {
      %18 = tpu.iota {dimensions = array<i32: 1>} : vector<1x128xi32>
      %19 = vector.broadcast %11 : i32 to vector<1x128xi32>
      %20 = arith.cmpi slt, %18, %19 : vector<1x128xi32>
      %cst_9 = arith.constant 0.000000e+00 : f32
      %21 = vector.broadcast %cst_9 : f32 to vector<1x128xf32>
      %22 = arith.select %20, %8, %21 : vector<1x128xi1>, vector<1x128xf32>
      %23 = vector.shape_cast %22 : vector<1x128xf32> to vector<1x1x128xf32>
      %cst_10 = arith.constant dense<0.000000e+00> : vector<1xf32>
      %24 = vector.multi_reduction <add>, %23, %cst_10 [1, 2] : vector<1x1x128xf32> to vector<1xf32>
      %25 = vector.shape_cast %24 : vector<1xf32> to vector<1x1x1xf32>
      %26 = vector.extract %25[0, 0, 0] : f32 from vector<1x1x1xf32>
      %c1_i32 = arith.constant 1 : i32
      %27 = arith.maxsi %11, %c1_i32 : i32
      %28 = arith.sitofp %27 : i32 to f32
      %29 = arith.divf %26, %28 : f32
      %30 = vector.broadcast %29 : f32 to vector<1x128xf32>
      %31 = arith.subf %8, %30 : vector<1x128xf32>
      %cst_11 = arith.constant 0.000000e+00 : f32
      %32 = vector.broadcast %cst_11 : f32 to vector<1x128xf32>
      %33 = arith.select %20, %31, %32 : vector<1x128xi1>, vector<1x128xf32>
      %34 = vector.broadcast %26 : f32 to vector<1x1x1xf32>
      %c0_12 = arith.constant 0 : index
      %c0_13 = arith.constant 0 : index
      %c0_14 = arith.constant 0 : index
      %35 = vector.load %arg5[%c0_12, %c0_13, %c0_14] : memref<1x1x1xf32, #tpu.memory_space<vmem>>, vector<1x1x1xf32>
      tpu.vector_store %arg5[%c0_12, %c0_13, %c0_14], %34 {strides = array<i32>} : memref<1x1x1xf32, #tpu.memory_space<vmem>>, vector<1x1x1xf32>,
      %36 = arith.mulf %33, %33 : vector<1x128xf32>
      %37 = vector.shape_cast %36 : vector<1x128xf32> to vector<1x1x128xf32>
      %cst_15 = arith.constant dense<0.000000e+00> : vector<1xf32>
      %38 = vector.multi_reduction <add>, %37, %cst_15 [1, 2] : vector<1x1x128xf32> to vector<1xf32>
      %39 = vector.shape_cast %38 : vector<1xf32> to vector<1x1x1xf32>
      %40 = vector.extract %39[0, 0, 0] : f32 from vector<1x1x1xf32>
      %41 = vector.broadcast %40 : f32 to vector<1x1x1xf32>
      %c0_16 = arith.constant 0 : index
      %c0_17 = arith.constant 0 : index
      %c0_18 = arith.constant 0 : index
      %42 = vector.load %arg6[%c0_16, %c0_17, %c0_18] : memref<1x1x1xf32, #tpu.memory_space<vmem>>, vector<1x1x1xf32>
      tpu.vector_store %arg6[%c0_16, %c0_17, %c0_18], %41 {strides = array<i32>} : memref<1x1x1xf32, #tpu.memory_space<vmem>>, vector<1x1x1xf32>,
    } else {
    }
    return
  }
  func.func @transform_0(%arg0: i32) -> (i32, i32) {
    %c0_i32 = arith.constant 0 : i32
    %c0_i32_0 = arith.constant 0 : i32
    return %c0_i32, %arg0 : i32, i32
  }
  func.func @transform_1(%arg0: i32) -> (i32, i32) {
    %c0_i32 = arith.constant 0 : i32
    %c0_i32_0 = arith.constant 0 : i32
    %c0_i32_1 = arith.constant 0 : i32
    return %c0_i32, %c0_i32_0 : i32, i32
  }
  func.func @transform_2(%arg0: i32) -> i32 {
    %c0_i32 = arith.constant 0 : i32
    %c0_i32_0 = arith.constant 0 : i32
    return %c0_i32 : i32
  }
  func.func @transform_3(%arg0: i32) -> (i32, i32) {
    %c0_i32 = arith.constant 0 : i32
    %c0_i32_0 = arith.constant 0 : i32
    return %c0_i32, %arg0 : i32, i32
  }
  func.func @transform_4(%arg0: i32) -> (i32, i32, i32) {
    %c0_i32 = arith.constant 0 : i32
    %c0_i32_0 = arith.constant 0 : i32
    %c0_i32_1 = arith.constant 0 : i32
    return %arg0, %c0_i32, %c0_i32_0 : i32, i32, i32
  }
  func.func @transform_5(%arg0: i32) -> (i32, i32, i32) {
    %c0_i32 = arith.constant 0 : i32
    %c0_i32_0 = arith.constant 0 : i32
    %c0_i32_1 = arith.constant 0 : i32
    return %arg0, %c0_i32, %c0_i32_0 : i32, i32, i32
  }
}

</mosaic_0001>

<llo_original>
// kernel: out_layer_forward.3
$region0: #{out_layer_forward.3}
  #allocation0 [shape = 'u32[]', space=smem, size = 0x4, offset = 0x4, fixed_abs, tag = 'smem constant byte address 0x4 - core index']
  #allocation1 [shape = 'u32[144,128]{1,0:T(1,128)}', space=vmem, size = 0x12000, scoped, tag = 'internal scratch']
  #allocation2 [shape = 'f32[1]{0:T(128)S(6)}', space=smem, size = 0x200, scoped, tag = 'scoped memory for out_layer_forward.3']
  #allocation3 [shape = 'f32[1]{0:T(128)S(6)}', space=smem, size = 0x200, scoped, tag = 'scoped memory for out_layer_forward.3']
  %s0 = inlined_call_operand.vmem [shape: f32[1,128], index: 0, kind: input, shape index: {}]
  %s1 = inlined_call_operand.<no memory space> [shape: f32[1], index: 1, kind: input, shape index: {}]
  %s2 = inlined_call_operand.<no memory space> [shape: f32[1], index: 2, kind: input, shape index: {}]
  %s3 = inlined_call_operand.vmem [shape: f32[1,128], index: 3, kind: output, shape index: {}]
  %s4 = sld [smem:[#allocation0]]
  $region22: #{out_layer_forward.3} parent=0
    _
  %s6 = ssub.s32 1, %s4
  %s7 = scalar_select 0, %s6, %s4
  %8 = sst [smem:[#allocation2]] %s1
  %9 = sst [smem:[#allocation3]] %s2
  // Predicated region
  $region2: #{out_layer_forward.3} parent=0 // pred_check
    _
  $region3: #{out_layer_forward.3} parent=0 // pred_check_branch
    %11 = sbr.rel (0) target = $region5
  $region4: #{out_layer_forward.3} parent=0 // pred_region
    _
  $region5: #{out_layer_forward.3} parent=0 // pred_fallthru
    _
  // Predicated region
  $region6: #{out_layer_forward.3} parent=0 // pred_check
    _
  $region7: #{out_layer_forward.3} parent=0 // pred_check_branch
    %13 = sbr.rel (0) target = $region9
  $region8: #{out_layer_forward.3} parent=0 // pred_region
    _
  $region9: #{out_layer_forward.3} parent=0 // pred_fallthru
    _
  // Predicated region
  $region10: #{out_layer_forward.3} parent=0 // pred_check
    _
  $region11: #{out_layer_forward.3} parent=0 // pred_check_branch
    %15 = sbr.rel (0) target = $region13
  $region12: #{out_layer_forward.3} parent=0 // pred_region
    _
  $region13: #{out_layer_forward.3} parent=0 // pred_fallthru
    _
  %v16 = vld [vmem:[%s0] sm:$0x1]
  %s17 = sld [smem:[#allocation2]]
  %v18 = vstv %s17
  %v19 = vmul.f32 %v16, %v18
  %s20 = sld [smem:[#allocation3]]
  %v21 = vstv %s20
  %v22 = vadd.f32 %v19, %v21
  %v23 = vmax.f32 %v22, 0.0
  %24 = vst [vmem:[%s3] sm:$0x1] %v23
  // Predicated region
  $region14: #{out_layer_forward.3} parent=0 // pred_check
    _
  $region15: #{out_layer_forward.3} parent=0 // pred_check_branch
    %26 = sbr.rel (0) target = $region17
  $region16: #{out_layer_forward.3} parent=0 // pred_region
    _
  $region17: #{out_layer_forward.3} parent=0 // pred_fallthru
    _
  // Predicated region
  $region18: #{out_layer_forward.3} parent=0 // pred_check
    _
  $region19: #{out_layer_forward.3} parent=0 // pred_check_branch
    %28 = sbr.rel (0) target = $region21
  $region20: #{out_layer_forward.3} parent=0 // pred_region
    _
  $region21: #{out_layer_forward.3} parent=0 // pred_fallthru
    _

// kernel: out_layer_forward.2
$region0: #{out_layer_forward.2}
  #allocation0 [shape = 'u32[]', space=smem, size = 0x4, offset = 0x4, fixed_abs, tag = 'smem constant byte address 0x4 - core index']
  #allocation1 [shape = 'u32[144,128]{1,0:T(1,128)}', space=vmem, size = 0x12000, scoped, tag = 'internal scratch']
  #allocation2 [shape = 'f32[1]{0:T(128)S(6)}', space=smem, size = 0x200, scoped, tag = 'scoped memory for out_layer_forward.2']
  %s0 = inlined_call_operand.vmem [shape: f32[5,128], index: 0, kind: input, shape index: {}]
  %s1 = inlined_call_operand.vmem [shape: f32[5,1], index: 1, kind: input, shape index: {}]
  %s2 = inlined_call_operand.<no memory space> [shape: f32[1], index: 2, kind: input, shape index: {}]
  %s3 = inlined_call_operand.vmem [shape: f32[1,128], index: 3, kind: output, shape index: {0}]
  %s4 = inlined_call_operand.hbm [shape: f32[1,1,1], index: 4, kind: output, shape index: {1}]
  %s5 = inlined_call_operand.hbm [shape: f32[1,1,1], index: 5, kind: output, shape index: {2}]
  %6 = xla_tuple %s3, %s4, %s5
  %s7 = sld [smem:[#allocation0]]
  $region46: #{out_layer_forward.2} parent=0
    _
  %s9 = ssub.s32 1, %s7
  %s10 = scalar_select 0, %s9, %s7
  %11 = sst [smem:[#allocation2]] %s2
  $region1: #{out_layer_forward.2} parent=0
    #allocation3 [shape = 'u8[512]{0}', space=vmem, size = 0x400, scoped, tag = 'output window, operand 1, single buffered']
    #allocation4 [shape = 's32[1]{0}', space=sflag, size = 0x4, scoped, tag = 'scoped memory for out_layer_forward.2']
    #allocation5 [shape = 'u8[512]{0}', space=vmem, size = 0x400, scoped, tag = 'output window, operand 2, single buffered']
    #allocation6 [shape = 's32[1]{0}', space=sflag, size = 0x4, scoped, tag = 'scoped memory for out_layer_forward.2']
    %12 = vsyncpa [#allocation4], 0
    %13 = vsyncpa [#allocation6], 0
    // Predicated region
    $region2: #{out_layer_forward.2} parent=1 // pred_check
      _
    $region3: #{out_layer_forward.2} parent=1 // pred_check_branch
      %15 = sbr.rel (0) target = $region5
    $region4: #{out_layer_forward.2} parent=1 // pred_region
      _
    $region5: #{out_layer_forward.2} parent=1 // pred_fallthru
      _
    // Predicated region
    $region6: #{out_layer_forward.2} parent=1 // pred_check
      _
    $region7: #{out_layer_forward.2} parent=1 // pred_check_branch
      %17 = sbr.rel (0) target = $region9
    $region8: #{out_layer_forward.2} parent=1 // pred_region
      _
    $region9: #{out_layer_forward.2} parent=1 // pred_fallthru
      _
    // Predicated region
    $region10: #{out_layer_forward.2} parent=1 // pred_check
      _
    $region11: #{out_layer_forward.2} parent=1 // pred_check_branch
      %19 = sbr.rel (0) target = $region13
    $region12: #{out_layer_forward.2} parent=1 // pred_region
      _
    $region13: #{out_layer_forward.2} parent=1 // pred_fallthru
      _
    %v20 = vld [vmem:[%s0] sm:$0x1f]
    %v21 = vld [vmem:[%s1] sm:$0x1f]
    %23 = vset.pattern.permute.xlu0 0
    %24 = vperm.xlu0 %23, %v21
    %v25 = vpop.permute.xlu0 %24
    %v27 = vmul.f32 %v20, %v25
    %vm28 = vcmask 1044480
    %v29 = vsel %vm28, %v27, 0.0
    %v30 = vrot.slane %v29, 4
    %v31 = vadd.f32 %v29, %v30
    %v32 = vrot.slane %v31, 2
    %v33 = vadd.f32 %v31, %v32
    %v34 = vrot.slane %v33, 1
    %v35 = vadd.f32 %v33, %v34
    %s36 = sld [smem:[#allocation2]]
    %v37 = vstv %s36
    %v38 = vadd.f32 %v35, %v37
    %39 = vst [vmem:[%s3] sm:$0x1] %v38
    %s40 = smul.u32 0, 128
    %s41 = ssub.s32 30, %s40
    %p42 = scmp.ge.s32.totalorder %s41, 128
    // Predicated region
    $region14: #{out_layer_forward.2} parent=1 // pred_check
      %p43 = pneg %p42
    $region15: #{out_layer_forward.2} parent=1 // pred_check_branch
      %45 = sbr.rel (%p43) target = $region17
    $region16: #{out_layer_forward.2} parent=1 // pred_region
      %vm46 = vcmask 1040384
      %v47 = vsel %vm46, %v38, 0.0
      %48 = vadd.xlane.f32.xlu0 %v47
      %v49 = vpop.xlane.xlu0 %48
      %v50 = vrot.slane %v49, 4
      %v51 = vadd.f32 %v49, %v50
      %v52 = vrot.slane %v51, 2
      %v53 = vadd.f32 %v51, %v52
      %v54 = vrot.slane %v53, 1
      %v55 = vadd.f32 %v53, %v54
      %s56 = vtos %v55
      %s57 = smul.f32 %s56, 0.0078125
      %v58 = vstv %s57
      %v59 = vsub.f32 %v38, %v58
      %v60 = vstv %s56
      %vm61 = vcmask 0
      %62 = vst.msk [vmem:[#allocation3] sm:$0x1] %vm61, %v60
      %v63 = vmul.f32 %v59, %v59
      %v64 = vsel %vm46, %v63, 0.0
      %65 = vadd.xlane.f32.xlu0 %v64
      %v66 = vpop.xlane.xlu0 %65
      %v67 = vrot.slane %v66, 4
      %v68 = vadd.f32 %v66, %v67
      %v69 = vrot.slane %v68, 2
      %v70 = vadd.f32 %v68, %v69
      %v71 = vrot.slane %v70, 1
      %v72 = vadd.f32 %v70, %v71
      %s73 = vtos %v72
      %v74 = vstv %s73
      %75 = vst.msk [vmem:[#allocation5] sm:$0x1] %vm61, %v74
    $region17: #{out_layer_forward.2} parent=1 // pred_fallthru
      _
    %p76 = scmp.lt.s32.totalorder %s41, 128
    // Predicated region
    $region18: #{out_layer_forward.2} parent=1 // pred_check
      %p77 = pneg %p76
    $region19: #{out_layer_forward.2} parent=1 // pred_check_branch
      %79 = sbr.rel (%p77) target = $region21
    $region20: #{out_layer_forward.2} parent=1 // pred_region
      %v80 = vlaneseq
      %v81 = vand.u32 %v80, 127
      %v82 = vstv %s41
      %vm83 = vcmp.lt.s32.totalorder %v81, %v82
      %v84 = vsel %vm83, %v38, 0.0
      %vm85 = vcmask 1040384
      %v86 = vsel %vm85, %v84, 0.0
      %87 = vadd.xlane.f32.xlu0 %v86
      %v88 = vpop.xlane.xlu0 %87
      %v89 = vrot.slane %v88, 4
      %v90 = vadd.f32 %v88, %v89
      %v91 = vrot.slane %v90, 2
      %v92 = vadd.f32 %v90, %v91
      %v93 = vrot.slane %v92, 1
      %v94 = vadd.f32 %v92, %v93
      %s95 = vtos %v94
      %p96 = scmp.gt.s32.totalorder %s41, 1
      %s97 = scalar_select %p96, %s41, 1
      %s98 = scvt.s32.f32 %s97
      %v99 = vstv %s98
      %v100 = vrcp.pop %v99
      %s101 = vtos %v100
      %s102 = smul.f32 %s95, %s101
      %v103 = vstv %s102
      %v104 = vsub.f32 %v38, %v103
      %v105 = vsel %vm83, %v104, 0.0
      %v106 = vstv %s95
      %vm107 = vcmask 0
      %108 = vst.msk [vmem:[#allocation3] sm:$0x1] %vm107, %v106
      %v109 = vmul.f32 %v105, %v105
      %v110 = vsel %vm85, %v109, 0.0
      %111 = vadd.xlane.f32.xlu0 %v110
      %v112 = vpop.xlane.xlu0 %111
      %v113 = vrot.slane %v112, 4
      %v114 = vadd.f32 %v112, %v113
      %v115 = vrot.slane %v114, 2
      %v116 = vadd.f32 %v114, %v115
      %v117 = vrot.slane %v116, 1
      %v118 = vadd.f32 %v116, %v117
      %s119 = vtos %v118
      %v120 = vstv %s119
      %121 = vst.msk [vmem:[#allocation5] sm:$0x1] %vm107, %v120
    $region21: #{out_layer_forward.2} parent=1 // pred_fallthru
      _
    // Predicated region
    $region22: #{out_layer_forward.2} parent=1 // pred_check
      _
    $region23: #{out_layer_forward.2} parent=1 // pred_check_branch
      %123 = sbr.rel (0) target = $region25
    $region24: #{out_layer_forward.2} parent=1 // pred_region
      _
    $region25: #{out_layer_forward.2} parent=1 // pred_fallthru
      _
    // Predicated region
    $region26: #{out_layer_forward.2} parent=1 // pred_check
      _
    $region27: #{out_layer_forward.2} parent=1 // pred_check_branch
      %125 = sbr.rel (0) target = $region29
    $region28: #{out_layer_forward.2} parent=1 // pred_region
      %s127 = ssub.s32 16, 16
      %128 = vsyncadd [#allocation4], %s127
      %s130 = sshll.u32 [#allocation3], 4
      %s131 = int_to_ptr.vmem [resolvable:$true] %s130
      %133 = dma.vmem_to_hbm [thread:$0]  %s131, 16, %s4, [#allocation4]
    $region29: #{out_layer_forward.2} parent=1 // pred_fallthru
      _
    // Predicated region
    $region30: #{out_layer_forward.2} parent=1 // pred_check
      _
    $region31: #{out_layer_forward.2} parent=1 // pred_check_branch
      %135 = sbr.rel (0) target = $region33
    $region32: #{out_layer_forward.2} parent=1 // pred_region
      %s137 = ssub.s32 16, 16
      %138 = vsyncadd [#allocation6], %s137
      %s140 = sshll.u32 [#allocation5], 4
      %s141 = int_to_ptr.vmem [resolvable:$true] %s140
      %143 = dma.vmem_to_hbm [thread:$0]  %s141, 16, %s5, [#allocation6]
    $region33: #{out_layer_forward.2} parent=1 // pred_fallthru
      _
    // Predicated region
    $region34: #{out_layer_forward.2} parent=1 // pred_check
      _
    $region35: #{out_layer_forward.2} parent=1 // pred_check_branch
      %145 = sbr.rel (0) target = $region37
    $region36: #{out_layer_forward.2} parent=1 // pred_region
      _
    $region37: #{out_layer_forward.2} parent=1 // pred_fallthru
      _
    // Predicated region
    $region38: #{out_layer_forward.2} parent=1 // pred_check
      _
    $region39: #{out_layer_forward.2} parent=1 // pred_check_branch
      %147 = sbr.rel (0) target = $region41
    $region40: #{out_layer_forward.2} parent=1 // pred_region
      %148 = dma.done [#allocation4], 16
    $region41: #{out_layer_forward.2} parent=1 // pred_fallthru
      _
    // Predicated region
    $region42: #{out_layer_forward.2} parent=1 // pred_check
      _
    $region43: #{out_layer_forward.2} parent=1 // pred_check_branch
      %150 = sbr.rel (0) target = $region45
    $region44: #{out_layer_forward.2} parent=1 // pred_region
      %151 = dma.done [#allocation6], 16
    $region45: #{out_layer_forward.2} parent=1 // pred_fallthru
      _
    %152 = vsyncpa [#allocation4], 1
    %153 = vsyncpa [#allocation6], 1

</llo_original>
